<compile_context>
chip_gen: v6e
topology: v6e:2x2x1
jax: 0.10.0
libtpu: 0.0.40
codegen_flags: <defaults>
</compile_context>

<pallas_src>
import functools
import math

import jax
import jax.numpy as jnp
from jax.experimental import pallas as pl
from jax.experimental.pallas import tpu as pltpu


SMOOTHING = 0.1
IGNORE_INDEX = 0


def _cdiv(a, b):
    return -(-a // b)


def _round_up(x, m):
    return _cdiv(x, m) * m


def _vmem_capacity_bytes():
    """Physical VMEM of the current generation; conservative fallback (v7x)."""
    try:
        return int(pltpu.get_tpu_info().vmem_capacity_bytes)
    except Exception:  # non-TPU trace / older API -> assume smallest (64 MiB)
        return 64 * 1024 * 1024


def _tile_plan(n_rows, n_class, itemsize, tile_rows=None):
    """Pick (tile_rows, vmem_limit_bytes).

    tile_rows is sized purely from a per-generation VMEM byte budget on the
    f32 compute footprint of one logits slab (no artificial row cap), rounded
    to the sublane packing of the input dtype, and additionally split so the
    1-D 'parallel' grid has >= 2 balanced tiles for v7x's two TensorCores.
    """
    vmem_cap = _vmem_capacity_bytes()
    # Budget for ONE logits slab, measured on its f32 compute footprint:
    # v5e/v6e have 128 MiB VMEM -> 8 MiB slabs; v7x has 64 MiB -> 4 MiB.
    f32_slab_budget = (8 << 20) if vmem_cap >= (96 << 20) else (4 << 20)

    row_align = 16 if itemsize == 2 else 8  # bf16 packs 16 sublanes per vreg

    if tile_rows is None:
        if n_rows <= row_align:
            tile_rows = max(1, n_rows)  # single full-extent block
        else:
            by_budget = max(
                row_align,
                (f32_slab_budget // (n_class * 4)) // row_align * row_align,
            )
            # >= 2 (even) balanced tiles so both v7x TensorCores get work.
            n_tiles = max(2, _cdiv(n_rows, by_budget))
            if n_tiles % 2:
                n_tiles += 1
            tile_rows = max(row_align, _round_up(_cdiv(n_rows, n_tiles), row_align))
            tile_rows = min(tile_rows, by_budget)

    # Derived scoped-VMEM limit: double-buffered input slab + label/output
    # columns + headroom for the in-kernel f32 intermediates, clamped to 80%
    # of this generation's physical VMEM (and floored at the default 32 MiB).
    in_slab = tile_rows * n_class * itemsize
    f32_slab = tile_rows * n_class * 4
    cols = 2 * tile_rows * (4 + 4)
    vmem_limit = 2 * in_slab + 8 * f32_slab + cols + (2 << 20)
    vmem_limit = min(max(vmem_limit, 32 << 20), int(vmem_cap * 0.8))
    return tile_rows, vmem_limit


def _label_smoothing_kernel(x_ref, t_ref, o_ref, *, smoothing, ignore_index):
    # x_ref: (TM, C) logits tile in its native dtype (f32 or bf16);
    # t_ref: (TM, 1) int32 labels tile.
    x = x_ref[...]
    t = t_ref[...]
    n_class = x.shape[-1]

    on = 1.0 - smoothing
    off = smoothing / (n_class - 1)
    # K = sum_c q_c * log(q_c): trace-time constant with xlogy semantics
    # (handles smoothing == 0 and smoothing == 1 without 0*log(0)).
    k_const = 0.0
    if on > 0.0:
        k_const += on * math.log(on)
    if off > 0.0:
        k_const += (n_class - 1) * off * math.log(off)

    valid = t != ignore_index                     # (TM, 1) bool
    t_np = jnp.where(valid, t, 0)                 # ignored -> class 0 (int select)

    # Row max / shift in the input dtype (max is exact for bf16); the f32
    # upcast is fused into the shifted value, so bf16 tiles never take a
    # standalone convert pass.  exp and both reductions accumulate in f32.
    x_max = jnp.max(x, axis=-1, keepdims=True)    # (TM, 1)
    z = (x - x_max).astype(jnp.float32)           # (TM, C) f32, z <= 0

    lse = jnp.log(jnp.sum(jnp.exp(z), axis=-1, keepdims=True))  # (TM, 1)

    # Single fused weighted reduction: sum_c q_c * z_c with
    #   q_c = on at the target class, off elsewhere   (sum_c q_c == 1).
    cls_idx = jax.lax.broadcasted_iota(jnp.int32, z.shape, 1)
    w = jnp.where(cls_idx == t_np, on, off)       # (TM, C) f32
    qz = jnp.sum(w * z, axis=-1, keepdims=True)   # (TM, 1)

    # loss_row = sum_c q_c (log q_c - log p_c) = K + lse - sum_c q_c z_c
    loss = k_const + lse - qz
    loss = jnp.where(valid, loss, 0.0)
    o_ref[...] = loss.astype(o_ref.dtype)


def label_smoothing_loss(inputs, targets, *, smoothing=SMOOTHING,
                         ignore_index=IGNORE_INDEX, reduction="none",
                         tile_rows=None):
    """inputs: (..., C) float logits (f32 or bf16); targets: (...) int labels."""
    n_class = inputs.shape[-1]
    x = inputs.reshape(-1, n_class)
    t = targets.reshape(-1, 1).astype(jnp.int32)
    n_rows = x.shape[0]

    tile_rows, vmem_limit = _tile_plan(n_rows, n_class, x.dtype.itemsize, tile_rows)
    grid = pl.cdiv(n_rows, tile_rows)

    kernel = functools.partial(
        _label_smoothing_kernel, smoothing=smoothing, ignore_index=ignore_index
    )

    # TODO(synk): for very small C (<~128) a lane-dense (1, TM) output block
    # would replace the masked (TM, 1) column stores; second-order here.
    out = pl.pallas_call(
        kernel,
        out_shape=jax.ShapeDtypeStruct((n_rows, 1), jnp.float32),
        grid_spec=pltpu.PrefetchScalarGridSpec(
            num_scalar_prefetch=0,
            grid=(grid,),
            in_specs=[
                pl.BlockSpec((tile_rows, n_class), lambda i: (i, 0)),
                pl.BlockSpec((tile_rows, 1), lambda i: (i, 0)),
            ],
            out_specs=pl.BlockSpec((tile_rows, 1), lambda i: (i, 0)),
        ),
        compiler_params=pltpu.CompilerParams(
            dimension_semantics=("parallel",),
            vmem_limit_bytes=int(vmem_limit),
        ),
    )(x, t)

    loss = out.reshape(-1)  # (N,)

    if reduction == "none":
        return loss
    elif reduction == "sum":
        return loss.sum()
    else:  # 'mean' over non-ignored tokens (matches the module's else-branch)
        mask_sum = (targets.reshape(-1) != ignore_index).astype(jnp.float32).sum()
        return loss.sum() / jnp.clip(mask_sum, 1e-08)


def _reference(inputs, targets, smoothing=SMOOTHING, ignore_index=IGNORE_INDEX):
    # Direct (non-simplified) formulation, mirroring the PyTorch module.
    n_class = inputs.shape[-1]
    x = inputs.reshape(-1, n_class).astype(jnp.float32)
    t = targets.reshape(-1).astype(jnp.int32)
    mask = (t != ignore_index).astype(jnp.float32)
    t_np = jnp.where(t == ignore_index, 0, t)
    one_hot = jax.nn.one_hot(t_np, n_class, dtype=jnp.float32)
    q = one_hot * (1.0 - smoothing) + (1.0 - one_hot) * smoothing / (n_class - 1)
    log_p = jax.nn.log_softmax(x, axis=-1)
    loss = jnp.sum(q * (jnp.log(q) - log_p), axis=-1)
    return loss * mask


if __name__ == "__main__":
    key = jax.random.PRNGKey(0)
    k_x, k_t = jax.random.split(key)

    batch, seq, n_class = 2, 8, 32
    logits = jax.random.normal(k_x, (batch, seq, n_class), dtype=jnp.float32)
    labels = jax.random.randint(k_t, (batch, seq), 0, n_class, dtype=jnp.int32)
    # ensure some ignore_index entries exist
    labels = labels.at[0, 0].set(IGNORE_INDEX).at[1, 3].set(IGNORE_INDEX)

    out = jax.block_until_ready(label_smoothing_loss(logits, labels))
    ref = _reference(logits, labels)
    assert out.shape == (batch * seq,)
    assert jnp.allclose(out, ref, atol=1e-4, rtol=1e-4), (out, ref)

    # reduction='sum' and 'mean' paths (thin XLA wrappers over the same kernel)
    s = jax.block_until_ready(label_smoothing_loss(logits, labels, reduction="sum"))
    assert jnp.allclose(s, ref.sum(), atol=1e-3, rtol=1e-4)
    m = jax.block_until_ready(label_smoothing_loss(logits, labels, reduction="mean"))
    mask_sum = (labels.reshape(-1) != IGNORE_INDEX).astype(jnp.float32).sum()
    assert jnp.allclose(m, ref.sum() / mask_sum, atol=1e-3, rtol=1e-4)

    # bf16 streaming path with a ragged row count (exercises the boundary
    # masking, the 16-row sublane alignment, and the fused f32 upcast).
    b2, s2 = 2, 11
    logits2 = jax.random.normal(k_x, (b2, s2, n_class), dtype=jnp.float32)
    labels2 = jax.random.randint(k_t, (b2, s2), 0, n_class, dtype=jnp.int32)
    logits2_bf = logits2.astype(jnp.bfloat16)
    out_bf = jax.block_until_ready(label_smoothing_loss(logits2_bf, labels2))
    ref_bf = _reference(logits2_bf.astype(jnp.float32), labels2)
    assert out_bf.shape == (b2 * s2,)
    assert jnp.allclose(out_bf, ref_bf, atol=5e-2, rtol=5e-2), (out_bf, ref_bf)

    print("KERNEL_OK")
</pallas_src>

<mosaic_0001>
module attributes {stable_mosaic.version = 11 : i64} {
  func.func @_label_smoothing_kernel(%arg0: i32, %arg1: memref<8x32xf32, #tpu.memory_space<vmem>>, %arg2: memref<8x1xi32, #tpu.memory_space<vmem>>, %arg3: memref<8x1xf32, #tpu.memory_space<vmem>>) attributes {dimension_semantics = [#tpu.dimension_semantics<parallel>], iteration_bounds = array<i64: 2>, scalar_prefetch = 0 : i64, scratch_operands = 0 : i64, tpu.core_type = #tpu.core_type<tc>, window_params = [{transform_indices = @transform_0, window_bounds = array<i64: 8, 32>}, {transform_indices = @transform_1, window_bounds = array<i64: 8, 1>}, {transform_indices = @transform_2, window_bounds = array<i64: 8, 1>}]} {
    %c0 = arith.constant 0 : index
    %c0_0 = arith.constant 0 : index
    %0 = vector.load %arg1[%c0, %c0_0] : memref<8x32xf32, #tpu.memory_space<vmem>>, vector<8x32xf32>
    %c0_1 = arith.constant 0 : index
    %c0_2 = arith.constant 0 : index
    %1 = vector.load %arg2[%c0_1, %c0_2] : memref<8x1xi32, #tpu.memory_space<vmem>>, vector<8x1xi32>
    %c0_i32 = arith.constant 0 : i32
    %2 = vector.broadcast %c0_i32 : i32 to vector<8x1xi32>
    %3 = arith.cmpi ne, %1, %2 : vector<8x1xi32>
    %c0_i32_3 = arith.constant 0 : i32
    %4 = vector.broadcast %c0_i32_3 : i32 to vector<8x1xi32>
    %5 = arith.select %3, %1, %4 : vector<8x1xi1>, vector<8x1xi32>
    %cst = arith.constant dense<0xFF800000> : vector<8xf32>
    %6 = vector.multi_reduction <maximumf>, %0, %cst [1] : vector<8x32xf32> to vector<8xf32>
    %7 = vector.shape_cast %6 : vector<8xf32> to vector<8x1xf32>
    %8 = vector.broadcast %7 : vector<8x1xf32> to vector<8x32xf32>
    %9 = arith.subf %0, %8 : vector<8x32xf32>
    %10 = math.exp %9 : vector<8x32xf32>
    %cst_4 = arith.constant dense<0.000000e+00> : vector<8xf32>
    %11 = vector.multi_reduction <add>, %10, %cst_4 [1] : vector<8x32xf32> to vector<8xf32>
    %12 = vector.shape_cast %11 : vector<8xf32> to vector<8x1xf32>
    %13 = math.log %12 : vector<8x1xf32>
    %14 = tpu.iota {dimensions = array<i32: 1>} : vector<8x32xi32>
    %15 = vector.broadcast %5 : vector<8x1xi32> to vector<8x32xi32>
    %16 = arith.cmpi eq, %14, %15 : vector<8x32xi32>
    %cst_5 = arith.constant 0.899999976 : f32
    %cst_6 = arith.constant 0.0032258064 : f32
    %17 = vector.broadcast %cst_5 : f32 to vector<8x32xf32>
    %18 = vector.broadcast %cst_6 : f32 to vector<8x32xf32>
    %19 = arith.select %16, %17, %18 : vector<8x32xi1>, vector<8x32xf32>
    %20 = arith.mulf %19, %9 : vector<8x32xf32>
    %cst_7 = arith.constant dense<0.000000e+00> : vector<8xf32>
    %21 = vector.multi_reduction <add>, %20, %cst_7 [1] : vector<8x32xf32> to vector<8xf32>
    %22 = vector.shape_cast %21 : vector<8xf32> to vector<8x1xf32>
    %cst_8 = arith.constant -0.668481708 : f32
    %23 = vector.broadcast %cst_8 : f32 to vector<8x1xf32>
    %24 = arith.addf %23, %13 : vector<8x1xf32>
    %25 = arith.subf %24, %22 : vector<8x1xf32>
    %cst_9 = arith.constant 0.000000e+00 : f32
    %26 = vector.broadcast %cst_9 : f32 to vector<8x1xf32>
    %27 = arith.select %3, %25, %26 : vector<8x1xi1>, vector<8x1xf32>
    %c0_10 = arith.constant 0 : index
    %c0_11 = arith.constant 0 : index
    %28 = vector.load %arg3[%c0_10, %c0_11] : memref<8x1xf32, #tpu.memory_space<vmem>>, vector<8x1xf32>
    tpu.vector_store %arg3[%c0_10, %c0_11], %27 {strides = array<i32>} : memref<8x1xf32, #tpu.memory_space<vmem>>, vector<8x1xf32>,
    return
  }
  func.func @transform_0(%arg0: i32) -> (i32, i32) {
    %c0_i32 = arith.constant 0 : i32
    %c0_i32_0 = arith.constant 0 : i32
    return %arg0, %c0_i32 : i32, i32
  }
  func.func @transform_1(%arg0: i32) -> (i32, i32) {
    %c0_i32 = arith.constant 0 : i32
    %c0_i32_0 = arith.constant 0 : i32
    return %arg0, %c0_i32 : i32, i32
  }
  func.func @transform_2(%arg0: i32) -> (i32, i32) {
    %c0_i32 = arith.constant 0 : i32
    %c0_i32_0 = arith.constant 0 : i32
    return %arg0, %c0_i32 : i32, i32
  }
}

</mosaic_0001>

<llo_original>
// kernel: tpu_custom_call.1
$region0: #{tpu_custom_call.1}
  #allocation0 [shape = 'u32[]', space=smem, size = 0x4, offset = 0x4, fixed_abs, tag = 'smem constant byte address 0x4 - core index']
  #allocation1 [shape = 'u32[144,128]{1,0:T(1,128)}', space=vmem, size = 0x12000, scoped, tag = 'internal scratch']
  %s0 = inlined_call_operand.vmem [shape: f32[16,32], index: 0, kind: input, shape index: {}]
  %s1 = inlined_call_operand.vmem [shape: s32[16,1], index: 1, kind: input, shape index: {}]
  %s2 = inlined_call_operand.vmem [shape: f32[16,1], index: 2, kind: output, shape index: {}]
  %s3 = sld [smem:[#allocation0]]
  $region41: #{tpu_custom_call.1} parent=0
    _
  %s5 = ssub.s32 1, %s3
  %s6 = scalar_select 0, %s5, %s3
  loop: start=0, step=1, limit=4
  $region2: #{tpu_custom_call.1} parent=0 // loop_pre_header
    _
  $region3: #{tpu_custom_call.1} parent=0 // loop_header
    %s8 = sphi 0, %s12
    %p9 = scmp.ge.s32.totalorder %s8, 4
    %s18 = sphi 0, %s20
    %s21 = sphi 0, %s18
    %s22 = sphi 0, %s21
    %s38 = sphi 0, %s22
    %s44 = sphi 0, %s46
    %s47 = sphi 0, %s44
    %s48 = sphi 0, %s47
    %s64 = sphi 0, %s48
    %s70 = sphi 0, %s72
    %s73 = sphi 0, %s70
    %s74 = sphi 0, %s73
    %s90 = sphi 0, %s74
  $region4: #{tpu_custom_call.1} parent=0 // loop_header_branch
    %11 = sbr.rel (%p9) target = $region8
  $region5: #{tpu_custom_call.1} parent=0 // loop_body
    %s13 = ssub.s32 %s8, 1
    %s14 = ssub.s32 %s8, 2
    %s15 = sadd.s32 %s8, 1
    %s16 = ssub.s32 %s8, %s15
    %p17 = scmp.eq.s32.totalorder %s16, 0
    %s19 = sadd.s32 %s18, 1
    %s20 = scalar_select %p17, %s18, %s19
    %p23 = pneg %p17
    %p24 = scmp.eq.s32.totalorder %s8, 1
    %p25 = por %p23, %p24
    %p26 = scmp.ne.s32.totalorder %s18, %s21
    %p27 = scmp.eq.s32.totalorder %s8, 0
    %p28 = por %p26, %p27
    %p29 = scmp.ne.s32.totalorder %s18, %s21
    %p30 = scmp.eq.s32.totalorder %s13, 1
    %p31 = por %p29, %p30
    %p32 = scmp.ne.s32.totalorder %s21, %s22
    %p33 = scmp.eq.s32.totalorder %s13, 0
    %p34 = por %p32, %p33
    %p35 = scmp.ne.s32.totalorder %s21, %s22
    %p36 = scmp.eq.s32.totalorder %s14, 1
    %p37 = por %p35, %p36
    %p39 = scmp.ne.s32.totalorder %s22, %s38
    %p40 = scmp.eq.s32.totalorder %s14, 0
    %p41 = por %p39, %p40
    %s42 = ssub.s32 %s8, %s15
    %p43 = scmp.eq.s32.totalorder %s42, 0
    %s45 = sadd.s32 %s44, 1
    %s46 = scalar_select %p43, %s44, %s45
    %p49 = pneg %p43
    %p50 = scmp.eq.s32.totalorder %s8, 1
    %p51 = por %p49, %p50
    %p52 = scmp.ne.s32.totalorder %s44, %s47
    %p53 = scmp.eq.s32.totalorder %s8, 0
    %p54 = por %p52, %p53
    %p55 = scmp.ne.s32.totalorder %s44, %s47
    %p56 = scmp.eq.s32.totalorder %s13, 1
    %p57 = por %p55, %p56
    %p58 = scmp.ne.s32.totalorder %s47, %s48
    %p59 = scmp.eq.s32.totalorder %s13, 0
    %p60 = por %p58, %p59
    %p61 = scmp.ne.s32.totalorder %s47, %s48
    %p62 = scmp.eq.s32.totalorder %s14, 1
    %p63 = por %p61, %p62
    %p65 = scmp.ne.s32.totalorder %s48, %s64
    %p66 = scmp.eq.s32.totalorder %s14, 0
    %p67 = por %p65, %p66
    %s68 = ssub.s32 %s8, %s15
    %p69 = scmp.eq.s32.totalorder %s68, 0
    %s71 = sadd.s32 %s70, 1
    %s72 = scalar_select %p69, %s70, %s71
    %p75 = pneg %p69
    %p76 = scmp.eq.s32.totalorder %s8, 1
    %p77 = por %p75, %p76
    %p78 = scmp.ne.s32.totalorder %s70, %s73
    %p79 = scmp.eq.s32.totalorder %s8, 0
    %p80 = por %p78, %p79
    %p81 = scmp.ne.s32.totalorder %s70, %s73
    %p82 = scmp.eq.s32.totalorder %s13, 1
    %p83 = por %p81, %p82
    %p84 = scmp.ne.s32.totalorder %s73, %s74
    %p85 = scmp.eq.s32.totalorder %s13, 0
    %p86 = por %p84, %p85
    %p87 = scmp.ne.s32.totalorder %s73, %s74
    %p88 = scmp.eq.s32.totalorder %s14, 1
    %p89 = por %p87, %p88
    %p91 = scmp.ne.s32.totalorder %s74, %s90
    %p92 = scmp.eq.s32.totalorder %s14, 0
    %p93 = por %p91, %p92
    %p94 = scmp.le.s32.totalorder 1, %s8
    %p95 = scmp.lt.s32.totalorder %s8, 3
    %p96 = pnand %p94, %p95
    %p97 = pneg %p96
    // Predicated region
    $region9: #{tpu_custom_call.1} parent=5 // pred_check
      _
    $region10: #{tpu_custom_call.1} parent=5 // pred_check_branch
      %99 = sbr.rel (%p96) target = $region12
    $region11: #{tpu_custom_call.1} parent=5 // pred_region
      %s100 = ssub.s32 %s8, 1
    $region12: #{tpu_custom_call.1} parent=5 // pred_fallthru
      _
    %p101 = scmp.lt.s32.totalorder %s8, 2
    // Predicated region
    $region13: #{tpu_custom_call.1} parent=5 // pred_check
      %p102 = pneg %p101
    $region14: #{tpu_custom_call.1} parent=5 // pred_check_branch
      %104 = sbr.rel (%p102) target = $region16
    $region15: #{tpu_custom_call.1} parent=5 // pred_region
      // Predicated region
      $region17: #{tpu_custom_call.1} parent=15 // pred_check
        %p105 = pneg %p28
      $region18: #{tpu_custom_call.1} parent=15 // pred_check_branch
        %107 = sbr.rel (%p105) target = $region20
      $region19: #{tpu_custom_call.1} parent=15 // pred_region
        %p108 = scmp.lt.s32.totalorder %s8, 1
        %s109 = scalar_select %p108, %s8, 1
        %s110 = smul.addr %s109, 8
        %s111 = scalar_lea.vmem %s0, %s110
      $region20: #{tpu_custom_call.1} parent=15 // pred_fallthru
        _
      // Predicated region
      $region21: #{tpu_custom_call.1} parent=15 // pred_check
        %p112 = pneg %p54
      $region22: #{tpu_custom_call.1} parent=15 // pred_check_branch
        %114 = sbr.rel (%p112) target = $region24
      $region23: #{tpu_custom_call.1} parent=15 // pred_region
        %p115 = scmp.lt.s32.totalorder %s8, 1
        %s116 = scalar_select %p115, %s8, 1
        %s117 = smul.addr %s116, 8
        %s118 = scalar_lea.vmem %s1, %s117
      $region24: #{tpu_custom_call.1} parent=15 // pred_fallthru
        _
    $region16: #{tpu_custom_call.1} parent=5 // pred_fallthru
      _
    %p119 = scmp.le.s32.totalorder 1, %s8
    %p120 = scmp.lt.s32.totalorder %s8, 3
    %p121 = pnand %p119, %p120
    %p122 = pneg %p121
    // Predicated region
    $region25: #{tpu_custom_call.1} parent=5 // pred_check
      _
    $region26: #{tpu_custom_call.1} parent=5 // pred_check_branch
      %124 = sbr.rel (%p121) target = $region28
    $region27: #{tpu_custom_call.1} parent=5 // pred_region
      %s125 = ssub.s32 %s8, 1
      %p126 = scmp.lt.s32.totalorder %s13, 1
      %s127 = scalar_select %p126, %s13, 1
      %s128 = smul.addr %s127, 8
      %s129 = scalar_lea.vmem %s0, %s128
      %p130 = pneg %p34
      %p131 = pneg %p31
      %p132 = scmp.lt.s32.totalorder %s13, 1
      %s133 = scalar_select %p132, %s13, 1
      %s134 = smul.addr %s133, 8
      %s135 = scalar_lea.vmem %s1, %s134
      %p136 = pneg %p60
      %p137 = pneg %p57
      %p138 = pneg %p86
      %p139 = pneg %p83
      %p140 = scmp.lt.s32.totalorder %s13, 1
      %s141 = scalar_select %p140, %s13, 1
      %s142 = smul.addr %s141, 8
      %s143 = scalar_lea.vmem %s2, %s142
      %p144 = scmp.lt.s32.totalorder %s13, 1
      %s145 = scalar_select %p144, %s13, 1
      %s146 = smul.addr %s145, 8
      %s147 = scalar_lea.vmem %s0, %s146
      %p148 = scmp.lt.s32.totalorder %s13, 1
      %s149 = scalar_select %p148, %s13, 1
      %s150 = smul.addr %s149, 8
      %s151 = scalar_lea.vmem %s1, %s150
      %p152 = scmp.lt.s32.totalorder %s13, 1
      %s153 = scalar_select %p152, %s13, 1
      %s154 = smul.addr %s153, 8
      %s155 = scalar_lea.vmem %s2, %s154
      %v156 = vld [vmem:[%s147] sm:$0xff]
      %v157 = vld [vmem:[%s151] sm:$0xff]
      %vm158 = vcmp.ne.s32.totalorder %v157, 0
      %vm159 = vcmask 261120
      %v160 = vsel %vm159, %v156, -inf
      %161 = vmax.xlane.f32.xlu0 %v160
      %v162 = vpop.xlane.xlu0 %161
      %v163 = vsub.f32 %v156, %v162
      %v164 = vmul.f32 %v163, 1.442695
      %v165 = vpow.pop %v164
      %v166 = vsel %vm159, %v165, 0.0
      %167 = vadd.xlane.f32.xlu0 %v166
      %v168 = vpop.xlane.xlu0 %167
      %v169 = vlog2.pop %v168
      %v170 = vmul.f32 %v169, 0.6931472
      %v171 = vlaneseq
      %v172 = vand.u32 %v171, 127
      %173 = vset.pattern.permute.xlu0 0
      %174 = vperm.xlu0 %173, %v157
      %v175 = vpop.permute.xlu0 %174
      %vm176 = vcmp.eq.s32.totalorder %v172, %v175
      %v177 = vsel %vm176, 0.9, 0.0032258064
      %v178 = vmul.f32 %v177, %v163
      %v179 = vsel %vm159, %v178, 0.0
      %180 = vadd.xlane.f32.xlu0 %v179
      %v181 = vpop.xlane.xlu0 %180
      %v182 = vadd.f32 %v170, -0.6684817
      %v183 = vsub.f32 %v182, %v181
      %v184 = vsel %vm158, %v183, 0.0
      %vm185 = vcmask 7168
      %186 = vst.msk [vmem:[%s155] sm:$0xff] %vm185, %v184
      %p187 = scmp.lt.s32.totalorder %s13, 1
      %s188 = scalar_select %p187, %s13, 1
      %s189 = smul.addr %s188, 8
      %s190 = scalar_lea.vmem %s2, %s189
      // Predicated region
      $region29: #{tpu_custom_call.1} parent=27 // pred_check
        %p191 = pneg %p83
      $region30: #{tpu_custom_call.1} parent=27 // pred_check_branch
        %193 = sbr.rel (%p191) target = $region32
      $region31: #{tpu_custom_call.1} parent=27 // pred_region
        _
      $region32: #{tpu_custom_call.1} parent=27 // pred_fallthru
        _
    $region28: #{tpu_custom_call.1} parent=5 // pred_fallthru
      _
    %p194 = scmp.le.s32.totalorder 2, %s8
    // Predicated region
    $region33: #{tpu_custom_call.1} parent=5 // pred_check
      %p195 = pneg %p194
    $region34: #{tpu_custom_call.1} parent=5 // pred_check_branch
      %197 = sbr.rel (%p195) target = $region36
    $region35: #{tpu_custom_call.1} parent=5 // pred_region
      %s198 = ssub.s32 %s8, 2
      // Predicated region
      $region37: #{tpu_custom_call.1} parent=35 // pred_check
        %p199 = pneg %p89
      $region38: #{tpu_custom_call.1} parent=35 // pred_check_branch
        %201 = sbr.rel (%p199) target = $region40
      $region39: #{tpu_custom_call.1} parent=35 // pred_region
        %p202 = scmp.lt.s32.totalorder %s14, 1
        %s203 = scalar_select %p202, %s14, 1
        %s204 = smul.addr %s203, 8
        %s205 = scalar_lea.vmem %s2, %s204
      $region40: #{tpu_custom_call.1} parent=35 // pred_fallthru
        _
    $region36: #{tpu_custom_call.1} parent=5 // pred_fallthru
      _
  $region6: #{tpu_custom_call.1} parent=0 // loop_footer
    %s12 = sadd.s32 1, %s8
  $region7: #{tpu_custom_call.1} parent=0 // loop_footer_branch
    %7 = sbr.rel target = $region3
  $region8: #{tpu_custom_call.1} parent=0 // loop_exit
    _

</llo_original>
